<compile_context>
chip_gen: v7x
topology: tpu7x:2x2x1
jax: 0.10.0
libtpu: 0.0.40
codegen_flags: <defaults>
</compile_context>

<pallas_src>
import jax
import jax.numpy as jnp
from jax.experimental import pallas as pl
from jax.experimental.pallas import tpu as pltpu


def _drop_path_kernel(mask_ref, x_ref, o_ref):
    # mask_ref: (TILE_B, 1) f32 — resident across all feature tiles of this
    #           batch tile (index_map depends only on the batch-tile index).
    # x_ref/o_ref: (TILE_B, TILE_F) tile of the flattened activation.
    o_ref[...] = (x_ref[...].astype(jnp.float32) * mask_ref[...]).astype(o_ref.dtype)


def _choose_tiles(b: int, f: int, itemsize: int,
                  target_block_bytes: int = 2 * 1024 * 1024) -> tuple[int, int]:
    """Pick (TILE_B, TILE_F).

    TILE_F is a lane-dense multiple of 128.  TILE_B is the full batch unless
    the batch is large and 8-aligned, in which case it is chunked so the
    double-buffered in+out blocks stay a few MiB (inside default scoped VMEM
    on v5e 16 MiB / v6e 32 MiB / v7x 32 MiB).
    """
    # Batch tile: only split when it is both big and sublane-aligned.
    if b % 8 == 0 and b > 256:
        tile_b = 256
    else:
        tile_b = b
    b_pad = ((tile_b + 7) // 8) * 8            # VMEM pads sublanes to 8

    if f <= 128:
        return tile_b, f                        # full (short) feature axis

    tile_f = target_block_bytes // max(1, b_pad * itemsize)
    tile_f = max(128, (tile_f // 128) * 128)    # lane-dense: multiple of 128
    f_pad = ((f + 127) // 128) * 128
    return tile_b, min(tile_f, f_pad)


def drop_path(x: jax.Array,
              drop_prob: float = 0.0,
              training: bool = False,
              scale_by_keep: bool = True,
              *,
              key: jax.Array | None = None) -> jax.Array:
    """Pallas DropPath forward. x: (B, ...) array (e.g. NCHW conv features)."""
    if drop_prob == 0.0 or not training:
        return x
    keep_prob = 1.0 - drop_prob
    if keep_prob <= 0.0:
        return jnp.zeros_like(x)
    if key is None:
        key = jax.random.PRNGKey(0)

    orig_shape = x.shape
    b = orig_shape[0]
    f = 1
    for d in orig_shape[1:]:
        f *= d
    x2 = x.reshape(b, f)

    # Per-sample mask (timm: bernoulli(keep_prob), optionally / keep_prob).
    keep = jax.random.bernoulli(key, p=keep_prob, shape=(b, 1))
    scale = (1.0 / keep_prob) if scale_by_keep else 1.0
    mask = jnp.where(keep, jnp.float32(scale), jnp.float32(0.0))

    itemsize = jnp.dtype(x2.dtype).itemsize
    tile_b, tile_f = _choose_tiles(b, f, itemsize)
    nb = pl.cdiv(b, tile_b)
    nf = pl.cdiv(f, tile_f)

    out = pl.pallas_call(
        _drop_path_kernel,
        out_shape=jax.ShapeDtypeStruct((b, f), x2.dtype),
        grid=(nb, nf),   # feature tiles innermost -> mask block stays resident
        in_specs=[
            # Tiny per-sample mask: block index changes only with the batch
            # tile, so it is fetched once per batch tile and kept in VMEM.
            pl.BlockSpec((tile_b, 1), lambda i, j: (i, 0)),
            # Activation tiles: auto-pipelined (double-buffered) HBM<->VMEM.
            pl.BlockSpec((tile_b, tile_f), lambda i, j: (i, j)),
        ],
        out_specs=pl.BlockSpec((tile_b, tile_f), lambda i, j: (i, j)),
        compiler_params=pltpu.CompilerParams(
            dimension_semantics=("parallel", "parallel"),
            vmem_limit_bytes=32 * 1024 * 1024),
        cost_estimate=pl.CostEstimate(
            flops=b * f,
            transcendentals=0,
            bytes_accessed=2 * b * f * itemsize + b * 4),
    )(mask, x2)

    return out.reshape(orig_shape)


class DropPath:
    """Stochastic-depth DropPath module (Pallas TPU forward)."""

    def __init__(self, drop_prob: float):
        self.drop_prob = drop_prob
        self.training = True

    def __call__(self, x: jax.Array, key: jax.Array | None = None) -> jax.Array:
        return drop_path(x, self.drop_prob, self.training, key=key)

    def extra_repr(self) -> str:
        return "p={}".format(self.drop_prob)


if __name__ == "__main__":
    data_key = jax.random.PRNGKey(0)
    # Small NCHW-shaped input consistent with typical conv features.
    x = jax.random.normal(data_key, (2, 4, 16, 16), dtype=jnp.float32)

    module = DropPath(drop_prob=0.25)
    module.training = True

    y = module(x, key=jax.random.PRNGKey(1234))
    y = jax.block_until_ready(y)

    # Sanity: each batch row is either exactly 0 or x / keep_prob.
    keep_prob = 1.0 - module.drop_prob
    xf = x.reshape(2, -1)
    yf = y.reshape(2, -1)
    for bidx in range(2):
        is_zero = bool(jnp.all(yf[bidx] == 0.0))
        is_scaled = bool(jnp.allclose(yf[bidx], xf[bidx] / keep_prob,
                                      rtol=1e-5, atol=1e-5))
        assert is_zero or is_scaled, "per-sample mask semantics violated"

    # bf16 path: mask math stays in f32 before the final cast.
    xb = x.astype(jnp.bfloat16)
    yb = jax.block_until_ready(module(xb, key=jax.random.PRNGKey(1234)))
    assert yb.dtype == jnp.bfloat16 and yb.shape == xb.shape

    # Eval mode / drop_prob==0 is identity.
    module.training = False
    y_eval = jax.block_until_ready(module(x))
    assert bool(jnp.all(y_eval == x))

    print("KERNEL_OK")
</pallas_src>

<mosaic_0001>
module attributes {stable_mosaic.version = 11 : i64} {
  func.func @_drop_path_kernel(%arg0: i32, %arg1: i32, %arg2: memref<2x1xf32, #tpu.memory_space<vmem>>, %arg3: memref<2x1024xf32, #tpu.memory_space<vmem>>, %arg4: memref<2x1024xf32, #tpu.memory_space<vmem>>) attributes {dimension_semantics = [#tpu.dimension_semantics<parallel>, #tpu.dimension_semantics<parallel>], iteration_bounds = array<i64: 1, 1>, scalar_prefetch = 0 : i64, scratch_operands = 0 : i64, tpu.core_type = #tpu.core_type<tc>, window_params = [{transform_indices = @transform_0, window_bounds = array<i64: 2, 1>}, {transform_indices = @transform_1, window_bounds = array<i64: 2, 1024>}, {transform_indices = @transform_2, window_bounds = array<i64: 2, 1024>}]} {
    %c0 = arith.constant 0 : index
    %c0_0 = arith.constant 0 : index
    %0 = vector.load %arg3[%c0, %c0_0] : memref<2x1024xf32, #tpu.memory_space<vmem>>, vector<2x1024xf32>
    %c0_1 = arith.constant 0 : index
    %c0_2 = arith.constant 0 : index
    %1 = vector.load %arg2[%c0_1, %c0_2] : memref<2x1xf32, #tpu.memory_space<vmem>>, vector<2x1xf32>
    %2 = vector.broadcast %1 : vector<2x1xf32> to vector<2x1024xf32>
    %3 = arith.mulf %0, %2 : vector<2x1024xf32>
    %c0_3 = arith.constant 0 : index
    %c0_4 = arith.constant 0 : index
    %4 = vector.load %arg4[%c0_3, %c0_4] : memref<2x1024xf32, #tpu.memory_space<vmem>>, vector<2x1024xf32>
    tpu.vector_store %arg4[%c0_3, %c0_4], %3 {strides = array<i32>} : memref<2x1024xf32, #tpu.memory_space<vmem>>, vector<2x1024xf32>,
    return
  }
  func.func @transform_0(%arg0: i32, %arg1: i32) -> (i32, i32) {
    %c0_i32 = arith.constant 0 : i32
    %c0_i32_0 = arith.constant 0 : i32
    return %arg0, %c0_i32 : i32, i32
  }
  func.func @transform_1(%arg0: i32, %arg1: i32) -> (i32, i32) {
    %c0_i32 = arith.constant 0 : i32
    return %arg0, %arg1 : i32, i32
  }
  func.func @transform_2(%arg0: i32, %arg1: i32) -> (i32, i32) {
    %c0_i32 = arith.constant 0 : i32
    return %arg0, %arg1 : i32, i32
  }
}

</mosaic_0001>

<llo_original>
// kernel: tpu_custom_call.1
$region0: #{tpu_custom_call.1}
  #allocation0 [shape = 'u32[]', space=smem, size = 0x4, offset = 0x4, fixed_abs, tag = 'smem constant byte address 0x4 - core index']
  #allocation1 [shape = 'u32[144,128]{1,0:T(1,128)}', space=vmem, size = 0x12000, scoped, tag = 'internal scratch']
  %s0 = inlined_call_operand.vmem [shape: f32[2,1], index: 0, kind: input, shape index: {}]
  %s1 = inlined_call_operand.hbm [shape: f32[2,1024], index: 1, kind: input, shape index: {}]
  %s2 = inlined_call_operand.hbm [shape: f32[2,1024], index: 2, kind: output, shape index: {}]
  %s3 = sld [smem:[#allocation0]]
  $region22: #{tpu_custom_call.1} parent=0
    _
  %s5 = ssub.s32 1, %s3
  %s6 = scalar_select 0, %s5, %s3
  $region1: #{tpu_custom_call.1} parent=0
    #allocation2 [shape = 'u8[8192]{0}', space=vmem, size = 0x2000, scoped, tag = 'input window, operand 1, single buffered']
    #allocation3 [shape = 's32[1]{0}', space=sflag, size = 0x4, scoped, tag = 'scoped memory for tpu_custom_call.1']
    #allocation4 [shape = 's32[1]{0}', space=sflag, size = 0x4, scoped, tag = 'scoped memory for tpu_custom_call.1']
    #allocation5 [shape = 'u8[8192]{0}', space=vmem, size = 0x2000, scoped, tag = 'output window, operand 0, single buffered']
    %7 = vsyncpa [#allocation3], 0
    %8 = vsyncpa [#allocation4], 0
    // Predicated region
    $region2: #{tpu_custom_call.1} parent=1 // pred_check
      _
    $region3: #{tpu_custom_call.1} parent=1 // pred_check_branch
      %10 = sbr.rel (0) target = $region5
    $region4: #{tpu_custom_call.1} parent=1 // pred_region
      _
    $region5: #{tpu_custom_call.1} parent=1 // pred_fallthru
      _
    // Predicated region
    $region6: #{tpu_custom_call.1} parent=1 // pred_check
      _
    $region7: #{tpu_custom_call.1} parent=1 // pred_check_branch
      %12 = sbr.rel (0) target = $region9
    $region8: #{tpu_custom_call.1} parent=1 // pred_region
      %s14 = ssub.s32 256, 256
      %15 = vsyncadd [#allocation3], %s14
      %s17 = sshll.u32 [#allocation2], 4
      %s18 = int_to_ptr.vmem [resolvable:$true] %s17
      %20 = dma.hbm_to_vmem [thread:$0]  %s1, 256, %s18, [#allocation3]
    $region9: #{tpu_custom_call.1} parent=1 // pred_fallthru
      _
    // Predicated region
    $region10: #{tpu_custom_call.1} parent=1 // pred_check
      _
    $region11: #{tpu_custom_call.1} parent=1 // pred_check_branch
      %22 = sbr.rel (0) target = $region13
    $region12: #{tpu_custom_call.1} parent=1 // pred_region
      %23 = dma.done [#allocation3], 256
    $region13: #{tpu_custom_call.1} parent=1 // pred_fallthru
      _
    %v24 = vld [vmem:[#allocation2] sm:$0xff]
    %v25 = vld [vmem:[#allocation2 + $0x8] sm:$0xff]
    %v26 = vld [vmem:[%s0] sm:$0x3]
    %28 = vset.pattern.permute.xlu0 0
    %29 = vperm.xlu0 %28, %v26
    %v30 = vpop.permute.xlu0 %29
    %v32 = vunpack.c.l.s4 269488144
    %v33 = vunpack.c.0.s8 %v32
    %v34 = vlaneseq
    %v35 = vshrl.u32 %v34, 7
    %v36 = vsub.s32 %v33, %v35
    %v37 = vrot.slane %v30, %v36
    %v39 = vmul.f32 %v24, %v37
    %v40 = vmul.f32 %v25, %v37
    %41 = vst [vmem:[#allocation5] sm:$0xff] %v39
    %42 = vst [vmem:[#allocation5 + $0x8] sm:$0xff] %v40
    // Predicated region
    $region14: #{tpu_custom_call.1} parent=1 // pred_check
      _
    $region15: #{tpu_custom_call.1} parent=1 // pred_check_branch
      %44 = sbr.rel (0) target = $region17
    $region16: #{tpu_custom_call.1} parent=1 // pred_region
      %s46 = ssub.s32 256, 256
      %47 = vsyncadd [#allocation4], %s46
      %s49 = sshll.u32 [#allocation5], 4
      %s50 = int_to_ptr.vmem [resolvable:$true] %s49
      %52 = dma.vmem_to_hbm [thread:$0]  %s50, 256, %s2, [#allocation4]
    $region17: #{tpu_custom_call.1} parent=1 // pred_fallthru
      _
    // Predicated region
    $region18: #{tpu_custom_call.1} parent=1 // pred_check
      _
    $region19: #{tpu_custom_call.1} parent=1 // pred_check_branch
      %54 = sbr.rel (0) target = $region21
    $region20: #{tpu_custom_call.1} parent=1 // pred_region
      %55 = dma.done [#allocation4], 256
    $region21: #{tpu_custom_call.1} parent=1 // pred_fallthru
      _
    %56 = vsyncpa [#allocation3], 1
    %57 = vsyncpa [#allocation4], 1

</llo_original>
